<compile_context>
chip_gen: v5e
topology: v5e:2x2
jax: 0.10.0
libtpu: 0.0.40
codegen_flags: <defaults>
</compile_context>

<pallas_src>
import functools

import jax
import jax.numpy as jnp
from jax.experimental import pallas as pl
from jax.experimental.pallas import tpu as pltpu


def _round_up(a, b):
    return (a + b - 1) // b * b


# ----------------------------------------------------------------------------
# Glue: GCN symmetric normalization (adds self loops, D^-1/2 (A+I) D^-1/2).
# Computed once per graph and cached by the caller.
# ----------------------------------------------------------------------------
def gcn_norm_adj(edge_index, num_nodes):
    """Dense normalized adjacency used by PyG's GCNConv (add_self_loops=True)."""
    loops = jnp.arange(num_nodes, dtype=edge_index.dtype)
    src = jnp.concatenate([edge_index[0], loops])
    dst = jnp.concatenate([edge_index[1], loops])
    deg = jnp.zeros((num_nodes,), jnp.float32).at[dst].add(1.0)
    dinv = jnp.where(deg > 0, jax.lax.rsqrt(deg), 0.0)
    vals = dinv[dst] * dinv[src]
    # A_hat[i, j]: message passing out[i] = sum_j A_hat[i, j] * x_j
    return jnp.zeros((num_nodes, num_nodes), jnp.float32).at[dst, src].add(vals)


# ----------------------------------------------------------------------------
# Kernel 1: XW = X @ W (optionally W = [Wc | Wr] fused), tiled over row blocks.
# ----------------------------------------------------------------------------
def _xw_kernel(x_ref, w_ref, o_ref):
    o_ref[...] = jnp.dot(x_ref[...], w_ref[...],
                         preferred_element_type=jnp.float32).astype(o_ref.dtype)


def _compute_xw(x_pad, w_cat, tile_m, compute_dtype):
    n_pad, f_pad = x_pad.shape
    f_out = w_cat.shape[1]
    return pl.pallas_call(
        _xw_kernel,
        out_shape=jax.ShapeDtypeStruct((n_pad, f_out), compute_dtype),
        grid_spec=pltpu.PrefetchScalarGridSpec(
            num_scalar_prefetch=0,
            grid=(n_pad // tile_m,),
            in_specs=[pl.BlockSpec((tile_m, f_pad), lambda i: (i, 0)),
                      pl.BlockSpec((f_pad, f_out), lambda i: (0, 0))],
            out_specs=pl.BlockSpec((tile_m, f_out), lambda i: (i, 0)),
        ),
        compiler_params=pltpu.CompilerParams(
            dimension_semantics=("parallel",)),
    )(x_pad, w_cat)


# ----------------------------------------------------------------------------
# Kernel 2: out = dropout(relu(A @ XWc + b) + residual), tiled A reduction.
# ----------------------------------------------------------------------------
def _make_agg_kernel(*, fused_graph_res, has_res_input, apply_dropout,
                     keep_threshold, inv_keep, f_pad):
    def kernel(*refs):
        it = iter(refs)
        a_ref = next(it)                                   # (TM, TK)
        xw_ref = next(it)                                  # (TK, Fout)
        b_ref = next(it)                                   # (1, F_pad)
        r_ref = next(it) if has_res_input else None        # (TM, F_pad)
        bits_ref = next(it) if apply_dropout else None     # (TM, F_pad) uint32
        o_ref = next(it)                                   # (TM, F_pad)
        acc_ref = next(it)                                 # (TM, Fout) f32

        k = pl.program_id(1)

        @pl.when(k == 0)
        def _():
            acc_ref[...] = jnp.zeros_like(acc_ref)

        acc_ref[...] += jnp.dot(a_ref[...], xw_ref[...],
                                preferred_element_type=jnp.float32)

        @pl.when(k == pl.num_programs(1) - 1)
        def _():
            acc = acc_ref[...]
            h = jnp.maximum(acc[:, :f_pad] + b_ref[...], 0.0)     # relu(conv + b)
            if fused_graph_res:
                res = acc[:, f_pad:]                               # A @ (X @ Wr)
            else:
                res = r_ref[...].astype(jnp.float32)               # X or X @ Wr
            out = h + res
            if apply_dropout:
                keep = bits_ref[...] >= jnp.uint32(keep_threshold)
                out = jnp.where(keep, out * jnp.float32(inv_keep), 0.0)
            o_ref[...] = out.astype(o_ref.dtype)

    return kernel


# ----------------------------------------------------------------------------
# Wrapper
# ----------------------------------------------------------------------------
@functools.partial(jax.jit,
                   static_argnames=("res_type", "dropout_p", "training",
                                    "tile_n", "compute_dtype"))
def resblock_forward(x, a_hat, w_conv, b_conv, w_res, dropout_key, *,
                     res_type, dropout_p, training,
                     tile_n=256, compute_dtype=jnp.float32):
    """ResBlock forward.  Weights are pre-transposed to [in, out] layout.

    tile_n: A_hat tile edge. 256 is 128-aligned (v5e MXU) and matches the
    256-wide v6e/v7x MXU; raise toward 512-1024 on v6e (128 MiB VMEM), keep
    <=512 on v7x (64 MiB VMEM).
    """
    n, f = x.shape
    fused = res_type in ("graph", "graph_linear")
    apply_dropout = bool(training) and float(dropout_p) > 0.0

    f_pad = _round_up(f, 128)
    n_pad = _round_up(n, tile_n)
    tm = tk = tile_n
    cdt = compute_dtype

    a_pad = jnp.pad(a_hat, ((0, n_pad - n), (0, n_pad - n))).astype(cdt)
    x_pad = jnp.pad(x, ((0, n_pad - n), (0, f_pad - f))).astype(cdt)
    wc_pad = jnp.pad(w_conv, ((0, f_pad - f), (0, f_pad - f))).astype(cdt)
    b_pad = jnp.pad(b_conv.reshape(1, f),
                    ((0, 0), (0, f_pad - f))).astype(jnp.float32)

    if res_type in ("linear", "graph", "graph_linear"):
        wr_pad = jnp.pad(w_res, ((0, f_pad - f), (0, f_pad - f))).astype(cdt)

    # Precompute X @ W once (fused conv + graph residual where possible).
    if fused:
        xw = _compute_xw(x_pad, jnp.concatenate([wc_pad, wr_pad], 1), tm, cdt)
        res_in, f_out = None, 2 * f_pad
    elif res_type == "linear":
        xw_cat = _compute_xw(x_pad, jnp.concatenate([wc_pad, wr_pad], 1), tm, cdt)
        xw, res_in, f_out = xw_cat[:, :f_pad], xw_cat[:, f_pad:], f_pad
    else:  # 'none'
        xw = _compute_xw(x_pad, wc_pad, tm, cdt)
        res_in, f_out = x_pad, f_pad

    args = [a_pad, xw, b_pad]
    in_specs = [
        pl.BlockSpec((tm, tk), lambda i, k: (i, k)),        # A_hat tile
        pl.BlockSpec((tk, f_out), lambda i, k: (k, 0)),     # XW(_cat) tile
        pl.BlockSpec((1, f_pad), lambda i, k: (0, 0)),      # bias
    ]
    if res_in is not None:   # only DMA a residual operand when it is used
        args.append(res_in)
        in_specs.append(pl.BlockSpec((tm, f_pad), lambda i, k: (i, 0)))

    keep_threshold, inv_keep = 0, 1.0
    if apply_dropout:
        p = float(dropout_p)
        keep_threshold = min(int(round(p * 2.0 ** 32)), 2 ** 32 - 1)
        inv_keep = 1.0 / (1.0 - p)
        bits = jax.random.bits(dropout_key, (n_pad, f_pad), dtype=jnp.uint32)
        args.append(bits)
        in_specs.append(pl.BlockSpec((tm, f_pad), lambda i, k: (i, 0)))

    kernel = _make_agg_kernel(
        fused_graph_res=fused,
        has_res_input=res_in is not None,
        apply_dropout=apply_dropout,
        keep_threshold=keep_threshold,
        inv_keep=inv_keep,
        f_pad=f_pad,
    )

    out_pad = pl.pallas_call(
        kernel,
        out_shape=jax.ShapeDtypeStruct((n_pad, f_pad), x.dtype),
        grid_spec=pltpu.PrefetchScalarGridSpec(
            num_scalar_prefetch=0,
            grid=(n_pad // tm, n_pad // tk),
            in_specs=in_specs,
            out_specs=pl.BlockSpec((tm, f_pad), lambda i, k: (i, 0)),
            scratch_shapes=[pltpu.VMEM((tm, f_out), jnp.float32)],
        ),
        compiler_params=pltpu.CompilerParams(
            dimension_semantics=("parallel", "arbitrary"),
            vmem_limit_bytes=64 * 1024 * 1024,
        ),
    )(*args)

    return out_pad[:n, :f]


# ----------------------------------------------------------------------------
# Pure-JAX reference (no dropout) for correctness check.
# ----------------------------------------------------------------------------
def resblock_ref(x, a_hat, w_conv, b_conv, w_res, res_type):
    h = jnp.maximum(a_hat @ (x @ w_conv) + b_conv[None, :], 0.0)
    if res_type == "none":
        res = x
    elif res_type == "linear":
        res = x @ w_res
    else:
        res = a_hat @ (x @ w_res)
    return h + res


if __name__ == "__main__":
    key = jax.random.PRNGKey(0)
    k1, k2, k3, kdrop = jax.random.split(key, 4)

    N, F = 12, 32          # nodes, nfeat
    x = jax.random.normal(k1, (N, F), jnp.float32)

    # Deterministic bidirectional ring graph, edge_index shape (2, 2N).
    fwd = jnp.stack([jnp.arange(N), (jnp.arange(N) + 1) % N])
    edge_index = jnp.concatenate([fwd, fwd[::-1]], axis=1).astype(jnp.int32)

    # Parameters (pre-transposed to [in, out]).  The original __init__ uses a
    # zero conv weight and identity residual; use small random conv values so
    # the matmul path is actually exercised, keep the identity residual.
    w_conv = 0.1 * jax.random.normal(k2, (F, F), jnp.float32)
    b_conv = 0.1 * jax.random.normal(k3, (F,), jnp.float32)
    w_res = jnp.eye(F, dtype=jnp.float32)

    # A_hat computed once per graph (hoisted out of the forward).
    a_hat = gcn_norm_adj(edge_index, N)

    dropout_p = 0.5

    # 1) eval mode (dropout off) -> exact check against pure-JAX reference
    for rt in ("linear", "graph", "graph_linear", "none"):
        out_eval = resblock_forward(x, a_hat, w_conv, b_conv, w_res, kdrop,
                                    res_type=rt, dropout_p=dropout_p,
                                    training=False)
        ref = resblock_ref(x, a_hat, w_conv, b_conv, w_res, rt)
        assert jnp.allclose(out_eval, ref, atol=1e-5, rtol=1e-5), \
            f"mismatch for type={rt}"

    # 2) training mode (dropout on) -> exercise the dropout path
    out_train = resblock_forward(x, a_hat, w_conv, b_conv, w_res, kdrop,
                                 res_type="graph", dropout_p=dropout_p,
                                 training=True)
    jax.block_until_ready(out_train)

    print("KERNEL_OK")
</pallas_src>

<mosaic_0001>
module attributes {stable_mosaic.version = 11 : i64} {
  func.func @_xw_kernel(%arg0: i32, %arg1: memref<256x128xf32, #tpu.memory_space<vmem>>, %arg2: memref<128x256xf32, #tpu.memory_space<vmem>>, %arg3: memref<256x256xf32, #tpu.memory_space<vmem>>) attributes {dimension_semantics = [#tpu.dimension_semantics<parallel>], iteration_bounds = array<i64: 1>, scalar_prefetch = 0 : i64, scratch_operands = 0 : i64, tpu.core_type = #tpu.core_type<tc>, window_params = [{transform_indices = @transform_0, window_bounds = array<i64: 256, 128>}, {pipeline_mode = #tpu.pipeline_mode<synchronous>, transform_indices = @transform_1, window_bounds = array<i64: 128, 256>}, {transform_indices = @transform_2, window_bounds = array<i64: 256, 256>}]} {
    %c0 = arith.constant 0 : index
    %c0_0 = arith.constant 0 : index
    %0 = vector.load %arg1[%c0, %c0_0] : memref<256x128xf32, #tpu.memory_space<vmem>>, vector<256x128xf32>
    %c0_1 = arith.constant 0 : index
    %c0_2 = arith.constant 0 : index
    %1 = vector.load %arg2[%c0_1, %c0_2] : memref<128x256xf32, #tpu.memory_space<vmem>>, vector<128x256xf32>
    %cst = arith.constant dense<0.000000e+00> : vector<256x256xf32>
    %2 = tpu.matmul %0, %1, %cst {dimension_numbers = #tpu.dot_dimension_numbers<[1], [0], [0], [1], [0, 0, 1, 1], [], []>} : vector<256x128xf32>, vector<128x256xf32>, vector<256x256xf32> -> vector<256x256xf32>
    %c0_3 = arith.constant 0 : index
    %c0_4 = arith.constant 0 : index
    %3 = vector.load %arg3[%c0_3, %c0_4] : memref<256x256xf32, #tpu.memory_space<vmem>>, vector<256x256xf32>
    tpu.vector_store %arg3[%c0_3, %c0_4], %2 {strides = array<i32>} : memref<256x256xf32, #tpu.memory_space<vmem>>, vector<256x256xf32>,
    return
  }
  func.func @transform_0(%arg0: i32) -> (i32, i32) {
    %c0_i32 = arith.constant 0 : i32
    %c0_i32_0 = arith.constant 0 : i32
    return %arg0, %c0_i32 : i32, i32
  }
  func.func @transform_1(%arg0: i32) -> (i32, i32) {
    %c0_i32 = arith.constant 0 : i32
    %c0_i32_0 = arith.constant 0 : i32
    %c0_i32_1 = arith.constant 0 : i32
    return %c0_i32, %c0_i32_0 : i32, i32
  }
  func.func @transform_2(%arg0: i32) -> (i32, i32) {
    %c0_i32 = arith.constant 0 : i32
    %c0_i32_0 = arith.constant 0 : i32
    return %arg0, %c0_i32 : i32, i32
  }
}

module attributes {stable_mosaic.version = 11 : i64} {
  func.func @kernel(%arg0: i32, %arg1: i32, %arg2: memref<256x256xf32, #tpu.memory_space<vmem>>, %arg3: memref<256x128xf32, #tpu.memory_space<vmem>>, %arg4: memref<1x128xf32, #tpu.memory_space<vmem>>, %arg5: memref<256x128xf32, #tpu.memory_space<vmem>>, %arg6: memref<256x128xf32, #tpu.memory_space<vmem>>, %arg7: memref<256x128xf32, #tpu.memory_space<vmem>>) attributes {dimension_semantics = [#tpu.dimension_semantics<parallel>, #tpu.dimension_semantics<arbitrary>], iteration_bounds = array<i64: 1, 1>, scalar_prefetch = 0 : i64, scratch_operands = 1 : i64, tpu.core_type = #tpu.core_type<tc>, window_params = [{transform_indices = @transform_0, window_bounds = array<i64: 256, 256>}, {transform_indices = @transform_1, window_bounds = array<i64: 256, 128>}, {pipeline_mode = #tpu.pipeline_mode<synchronous>, transform_indices = @transform_2, window_bounds = array<i64: 1, 128>}, {transform_indices = @transform_3, window_bounds = array<i64: 256, 128>}, {transform_indices = @transform_4, window_bounds = array<i64: 256, 128>}]} {
    %c0_i32 = arith.constant 0 : i32
    %0 = arith.cmpi eq, %arg1, %c0_i32 : i32
    %1 = arith.extui %0 : i1 to i32
    %c0_i32_0 = arith.constant 0 : i32
    %2 = arith.cmpi ne, %1, %c0_i32_0 : i32
    scf.if %2 {
      %cst_10 = arith.constant 0.000000e+00 : f32
      %12 = vector.broadcast %cst_10 : f32 to vector<256x128xf32>
      %c0_11 = arith.constant 0 : index
      %c0_12 = arith.constant 0 : index
      %13 = vector.load %arg7[%c0_11, %c0_12] : memref<256x128xf32, #tpu.memory_space<vmem>>, vector<256x128xf32>
      tpu.vector_store %arg7[%c0_11, %c0_12], %12 {strides = array<i32>} : memref<256x128xf32, #tpu.memory_space<vmem>>, vector<256x128xf32>,
    } else {
    }
    %c0 = arith.constant 0 : index
    %c0_1 = arith.constant 0 : index
    %3 = vector.load %arg7[%c0, %c0_1] : memref<256x128xf32, #tpu.memory_space<vmem>>, vector<256x128xf32>
    %c0_2 = arith.constant 0 : index
    %c0_3 = arith.constant 0 : index
    %4 = vector.load %arg2[%c0_2, %c0_3] : memref<256x256xf32, #tpu.memory_space<vmem>>, vector<256x256xf32>
    %c0_4 = arith.constant 0 : index
    %c0_5 = arith.constant 0 : index
    %5 = vector.load %arg3[%c0_4, %c0_5] : memref<256x128xf32, #tpu.memory_space<vmem>>, vector<256x128xf32>
    %cst = arith.constant dense<0.000000e+00> : vector<256x128xf32>
    %6 = tpu.matmul %4, %5, %cst {dimension_numbers = #tpu.dot_dimension_numbers<[1], [0], [0], [1], [0, 0, 1, 1], [], []>} : vector<256x256xf32>, vector<256x128xf32>, vector<256x128xf32> -> vector<256x128xf32>
    %7 = arith.addf %3, %6 : vector<256x128xf32>
    %c0_6 = arith.constant 0 : index
    %c0_7 = arith.constant 0 : index
    %8 = vector.load %arg7[%c0_6, %c0_7] : memref<256x128xf32, #tpu.memory_space<vmem>>, vector<256x128xf32>
    tpu.vector_store %arg7[%c0_6, %c0_7], %7 {strides = array<i32>} : memref<256x128xf32, #tpu.memory_space<vmem>>, vector<256x128xf32>,
    %c0_i32_8 = arith.constant 0 : i32
    %9 = arith.cmpi eq, %arg1, %c0_i32_8 : i32
    %10 = arith.extui %9 : i1 to i32
    %c0_i32_9 = arith.constant 0 : i32
    %11 = arith.cmpi ne, %10, %c0_i32_9 : i32
    scf.if %11 {
      %c0_10 = arith.constant 0 : index
      %c0_11 = arith.constant 0 : index
      %12 = vector.load %arg7[%c0_10, %c0_11] : memref<256x128xf32, #tpu.memory_space<vmem>>, vector<256x128xf32>
      %c0_12 = arith.constant 0 : index
      %c0_13 = arith.constant 0 : index
      %13 = vector.load %arg4[%c0_12, %c0_13] : memref<1x128xf32, #tpu.memory_space<vmem>>, vector<1x128xf32>
      %14 = vector.broadcast %13 : vector<1x128xf32> to vector<256x128xf32>
      %15 = arith.addf %12, %14 : vector<256x128xf32>
      %cst_14 = arith.constant 0.000000e+00 : f32
      %16 = vector.broadcast %cst_14 : f32 to vector<256x128xf32>
      %17 = arith.maximumf %15, %16 : vector<256x128xf32>
      %c0_15 = arith.constant 0 : index
      %c0_16 = arith.constant 0 : index
      %18 = vector.load %arg5[%c0_15, %c0_16] : memref<256x128xf32, #tpu.memory_space<vmem>>, vector<256x128xf32>
      %19 = arith.addf %17, %18 : vector<256x128xf32>
      %c0_17 = arith.constant 0 : index
      %c0_18 = arith.constant 0 : index
      %20 = vector.load %arg6[%c0_17, %c0_18] : memref<256x128xf32, #tpu.memory_space<vmem>>, vector<256x128xf32>
      tpu.vector_store %arg6[%c0_17, %c0_18], %19 {strides = array<i32>} : memref<256x128xf32, #tpu.memory_space<vmem>>, vector<256x128xf32>,
    } else {
    }
    return
  }
  func.func @transform_0(%arg0: i32, %arg1: i32) -> (i32, i32) {
    %c0_i32 = arith.constant 0 : i32
    return %arg0, %arg1 : i32, i32
  }
  func.func @transform_1(%arg0: i32, %arg1: i32) -> (i32, i32) {
    %c0_i32 = arith.constant 0 : i32
    %c0_i32_0 = arith.constant 0 : i32
    return %arg1, %c0_i32 : i32, i32
  }
  func.func @transform_2(%arg0: i32, %arg1: i32) -> (i32, i32) {
    %c0_i32 = arith.constant 0 : i32
    %c0_i32_0 = arith.constant 0 : i32
    %c0_i32_1 = arith.constant 0 : i32
    return %c0_i32, %c0_i32_0 : i32, i32
  }
  func.func @transform_3(%arg0: i32, %arg1: i32) -> (i32, i32) {
    %c0_i32 = arith.constant 0 : i32
    %c0_i32_0 = arith.constant 0 : i32
    return %arg0, %c0_i32 : i32, i32
  }
  func.func @transform_4(%arg0: i32, %arg1: i32) -> (i32, i32) {
    %c0_i32 = arith.constant 0 : i32
    %c0_i32_0 = arith.constant 0 : i32
    return %arg0, %c0_i32 : i32, i32
  }
}

</mosaic_0001>

<llo_original>
// kernel: resblock_forward.2
$region0: #{resblock_forward.2}
  #allocation0 [shape = 'u32[]', space=smem, size = 0x4, offset = 0x4, fixed_abs, tag = 'smem constant byte address 0x4 - core index']
  #allocation1 [shape = 'u32[72,128]{1,0:T(1,128)}', space=vmem, size = 0x9000, scoped, tag = 'internal scratch']
  %s0 = inlined_call_operand.vmem [shape: f32[256,128], index: 0, kind: input, shape index: {}]
  %s1 = inlined_call_operand.vmem [shape: f32[128,256], index: 1, kind: input, shape index: {}]
  %s2 = inlined_call_operand.vmem [shape: f32[256,256], index: 2, kind: output, shape index: {}]
  %s3 = sld [smem:[#allocation0]]
  $region18: #{resblock_forward.2} parent=0
    _
  %s5 = ssub.s32 1, %s3
  %s6 = scalar_select 0, %s5, %s3
  // Predicated region
  $region2: #{resblock_forward.2} parent=0 // pred_check
    _
  $region3: #{resblock_forward.2} parent=0 // pred_check_branch
    %8 = sbr.rel (0) target = $region5
  $region4: #{resblock_forward.2} parent=0 // pred_region
    _
  $region5: #{resblock_forward.2} parent=0 // pred_fallthru
    _
  // Predicated region
  $region6: #{resblock_forward.2} parent=0 // pred_check
    _
  $region7: #{resblock_forward.2} parent=0 // pred_check_branch
    %10 = sbr.rel (0) target = $region9
  $region8: #{resblock_forward.2} parent=0 // pred_region
    _
  $region9: #{resblock_forward.2} parent=0 // pred_fallthru
    _
  %v11 = vld [vmem:[%s0] sm:$0xff]
  %v12 = vld [vmem:[%s0 + $0x8] sm:$0xff]
  %v13 = vld [vmem:[%s0 + $0x10] sm:$0xff]
  %v14 = vld [vmem:[%s0 + $0x18] sm:$0xff]
  %v15 = vld [vmem:[%s0 + $0x20] sm:$0xff]
  %v16 = vld [vmem:[%s0 + $0x28] sm:$0xff]
  %v17 = vld [vmem:[%s0 + $0x30] sm:$0xff]
  %v18 = vld [vmem:[%s0 + $0x38] sm:$0xff]
  %v19 = vld [vmem:[%s0 + $0x40] sm:$0xff]
  %v20 = vld [vmem:[%s0 + $0x48] sm:$0xff]
  %v21 = vld [vmem:[%s0 + $0x50] sm:$0xff]
  %v22 = vld [vmem:[%s0 + $0x58] sm:$0xff]
  %v23 = vld [vmem:[%s0 + $0x60] sm:$0xff]
  %v24 = vld [vmem:[%s0 + $0x68] sm:$0xff]
  %v25 = vld [vmem:[%s0 + $0x70] sm:$0xff]
  %v26 = vld [vmem:[%s0 + $0x78] sm:$0xff]
  %v27 = vld [vmem:[%s0 + $0x80] sm:$0xff]
  %v28 = vld [vmem:[%s0 + $0x88] sm:$0xff]
  %v29 = vld [vmem:[%s0 + $0x90] sm:$0xff]
  %v30 = vld [vmem:[%s0 + $0x98] sm:$0xff]
  %v31 = vld [vmem:[%s0 + $0xa0] sm:$0xff]
  %v32 = vld [vmem:[%s0 + $0xa8] sm:$0xff]
  %v33 = vld [vmem:[%s0 + $0xb0] sm:$0xff]
  %v34 = vld [vmem:[%s0 + $0xb8] sm:$0xff]
  %v35 = vld [vmem:[%s0 + $0xc0] sm:$0xff]
  %v36 = vld [vmem:[%s0 + $0xc8] sm:$0xff]
  %v37 = vld [vmem:[%s0 + $0xd0] sm:$0xff]
  %v38 = vld [vmem:[%s0 + $0xd8] sm:$0xff]
  %v39 = vld [vmem:[%s0 + $0xe0] sm:$0xff]
  %v40 = vld [vmem:[%s0 + $0xe8] sm:$0xff]
  %v41 = vld [vmem:[%s0 + $0xf0] sm:$0xff]
  %v42 = vld [vmem:[%s0 + $0xf8] sm:$0xff]
  %v43 = vld [vmem:[%s1] sm:$0xff]
  %v44 = vld [vmem:[%s1 + $0x8] sm:$0xff]
  %v45 = vld [vmem:[%s1 + $0x10] sm:$0xff]
  %v46 = vld [vmem:[%s1 + $0x18] sm:$0xff]
  %v47 = vld [vmem:[%s1 + $0x20] sm:$0xff]
  %v48 = vld [vmem:[%s1 + $0x28] sm:$0xff]
  %v49 = vld [vmem:[%s1 + $0x30] sm:$0xff]
  %v50 = vld [vmem:[%s1 + $0x38] sm:$0xff]
  %v51 = vld [vmem:[%s1 + $0x40] sm:$0xff]
  %v52 = vld [vmem:[%s1 + $0x48] sm:$0xff]
  %v53 = vld [vmem:[%s1 + $0x50] sm:$0xff]
  %v54 = vld [vmem:[%s1 + $0x58] sm:$0xff]
  %v55 = vld [vmem:[%s1 + $0x60] sm:$0xff]
  %v56 = vld [vmem:[%s1 + $0x68] sm:$0xff]
  %v57 = vld [vmem:[%s1 + $0x70] sm:$0xff]
  %v58 = vld [vmem:[%s1 + $0x78] sm:$0xff]
  %v59 = vld [vmem:[%s1 + $0x80] sm:$0xff]
  %v60 = vld [vmem:[%s1 + $0x88] sm:$0xff]
  %v61 = vld [vmem:[%s1 + $0x90] sm:$0xff]
  %v62 = vld [vmem:[%s1 + $0x98] sm:$0xff]
  %v63 = vld [vmem:[%s1 + $0xa0] sm:$0xff]
  %v64 = vld [vmem:[%s1 + $0xa8] sm:$0xff]
  %v65 = vld [vmem:[%s1 + $0xb0] sm:$0xff]
  %v66 = vld [vmem:[%s1 + $0xb8] sm:$0xff]
  %v67 = vld [vmem:[%s1 + $0xc0] sm:$0xff]
  %v68 = vld [vmem:[%s1 + $0xc8] sm:$0xff]
  %v69 = vld [vmem:[%s1 + $0xd0] sm:$0xff]
  %v70 = vld [vmem:[%s1 + $0xd8] sm:$0xff]
  %v71 = vld [vmem:[%s1 + $0xe0] sm:$0xff]
  %v72 = vld [vmem:[%s1 + $0xe8] sm:$0xff]
  %v73 = vld [vmem:[%s1 + $0xf0] sm:$0xff]
  %v74 = vld [vmem:[%s1 + $0xf8] sm:$0xff]
  %75 = vmatpush.msra.mxu0 %v73
  %76 = vmatpush.msra.mxu0 %v71
  %77 = vmatpush.msra.mxu0 %v69
  %78 = vmatpush.msra.mxu0 %v67
  %79 = vmatpush.msra.mxu0 %v65
  %80 = vmatpush.msra.mxu0 %v63
  %81 = vmatpush.msra.mxu0 %v61
  %82 = vmatpush.msra.mxu0 %v59
  %83 = vmatpush.msra.mxu0 %v57
  %84 = vmatpush.msra.mxu0 %v55
  %85 = vmatpush.msra.mxu0 %v53
  %86 = vmatpush.msra.mxu0 %v51
  %87 = vmatpush.msra.mxu0 %v49
  %88 = vmatpush.msra.mxu0 %v47
  %89 = vmatpush.msra.mxu0 %v45
  %90 = vmatpush.msra.mxu0 %v43
  %91 = vmatmul.f32.gmra.mxu0 %v11
  %v92 = vpop.f32.mrf.mxu0
  %v93 = vadd.f32 0.0, %v92
  %94 = vmatmul.f32.gmra.mxu0 %v12
  %v95 = vpop.f32.mrf.mxu0
  %v96 = vadd.f32 0.0, %v95
  %97 = vmatmul.f32.gmra.mxu0 %v13
  %v98 = vpop.f32.mrf.mxu0
  %v99 = vadd.f32 0.0, %v98
  %100 = vmatmul.f32.gmra.mxu0 %v14
  %v101 = vpop.f32.mrf.mxu0
  %v102 = vadd.f32 0.0, %v101
  %103 = vmatmul.f32.gmra.mxu0 %v15
  %v104 = vpop.f32.mrf.mxu0
  %v105 = vadd.f32 0.0, %v104
  %106 = vmatmul.f32.gmra.mxu0 %v16
  %v107 = vpop.f32.mrf.mxu0
  %v108 = vadd.f32 0.0, %v107
  %109 = vmatmul.f32.gmra.mxu0 %v17
  %v110 = vpop.f32.mrf.mxu0
  %v111 = vadd.f32 0.0, %v110
  %112 = vmatmul.f32.gmra.mxu0 %v18
  %v113 = vpop.f32.mrf.mxu0
  %v114 = vadd.f32 0.0, %v113
  %115 = vmatmul.f32.gmra.mxu0 %v19
  %v116 = vpop.f32.mrf.mxu0
  %v117 = vadd.f32 0.0, %v116
  %118 = vmatmul.f32.gmra.mxu0 %v20
  %v119 = vpop.f32.mrf.mxu0
  %v120 = vadd.f32 0.0, %v119
  %121 = vmatmul.f32.gmra.mxu0 %v21
  %v122 = vpop.f32.mrf.mxu0
  %v123 = vadd.f32 0.0, %v122
  %124 = vmatmul.f32.gmra.mxu0 %v22
  %v125 = vpop.f32.mrf.mxu0
  %v126 = vadd.f32 0.0, %v125
  %127 = vmatmul.f32.gmra.mxu0 %v23
  %v128 = vpop.f32.mrf.mxu0
  %v129 = vadd.f32 0.0, %v128
  %130 = vmatmul.f32.gmra.mxu0 %v24
  %v131 = vpop.f32.mrf.mxu0
  %v132 = vadd.f32 0.0, %v131
  %133 = vmatmul.f32.gmra.mxu0 %v25
  %v134 = vpop.f32.mrf.mxu0
  %v135 = vadd.f32 0.0, %v134
  %136 = vmatmul.f32.gmra.mxu0 %v26
  %v137 = vpop.f32.mrf.mxu0
  %v138 = vadd.f32 0.0, %v137
  %139 = vmatmul.f32.gmra.mxu0 %v27
  %v140 = vpop.f32.mrf.mxu0
  %v141 = vadd.f32 0.0, %v140
  %142 = vmatmul.f32.gmra.mxu0 %v28
  %v143 = vpop.f32.mrf.mxu0
  %v144 = vadd.f32 0.0, %v143
  %145 = vmatmul.f32.gmra.mxu0 %v29
  %v146 = vpop.f32.mrf.mxu0
  %v147 = vadd.f32 0.0, %v146
  %148 = vmatmul.f32.gmra.mxu0 %v30
  %v149 = vpop.f32.mrf.mxu0
  %v150 = vadd.f32 0.0, %v149
  %151 = vmatmul.f32.gmra.mxu0 %v31
  %v152 = vpop.f32.mrf.mxu0
  %v153 = vadd.f32 0.0, %v152
  %154 = vmatmul.f32.gmra.mxu0 %v32
  %v155 = vpop.f32.mrf.mxu0
  %v156 = vadd.f32 0.0, %v155
  %157 = vmatmul.f32.gmra.mxu0 %v33
  %v158 = vpop.f32.mrf.mxu0
  %v159 = vadd.f32 0.0, %v158
  %160 = vmatmul.f32.gmra.mxu0 %v34
  %v161 = vpop.f32.mrf.mxu0
  %v162 = vadd.f32 0.0, %v161
  %163 = vmatmul.f32.gmra.mxu0 %v35
  %v164 = vpop.f32.mrf.mxu0
  %v165 = vadd.f32 0.0, %v164
  %166 = vmatmul.f32.gmra.mxu0 %v36
  %v167 = vpop.f32.mrf.mxu0
  %v168 = vadd.f32 0.0, %v167
  %169 = vmatmul.f32.gmra.mxu0 %v37
  %v170 = vpop.f32.mrf.mxu0
  %v171 = vadd.f32 0.0, %v170
  %172 = vmatmul.f32.gmra.mxu0 %v38
  %v173 = vpop.f32.mrf.mxu0
  %v174 = vadd.f32 0.0, %v173
  %175 = vmatmul.f32.gmra.mxu0 %v39
  %v176 = vpop.f32.mrf.mxu0
  %v177 = vadd.f32 0.0, %v176
  %178 = vmatmul.f32.gmra.mxu0 %v40
  %v179 = vpop.f32.mrf.mxu0
  %v180 = vadd.f32 0.0, %v179
  %181 = vmatmul.f32.gmra.mxu0 %v41
  %v182 = vpop.f32.mrf.mxu0
  %v183 = vadd.f32 0.0, %v182
  %184 = vmatmul.f32.gmra.mxu0 %v42
  %v185 = vpop.f32.mrf.mxu0
  %v186 = vadd.f32 0.0, %v185
  %187 = vdwg.mxu0
  %188 = vmatpush.msra.mxu0 %v74
  %189 = vmatpush.msra.mxu0 %v72
  %190 = vmatpush.msra.mxu0 %v70
  %191 = vmatpush.msra.mxu0 %v68
  %192 = vmatpush.msra.mxu0 %v66
  %193 = vmatpush.msra.mxu0 %v64
  %194 = vmatpush.msra.mxu0 %v62
  %195 = vmatpush.msra.mxu0 %v60
  %196 = vmatpush.msra.mxu0 %v58
  %197 = vmatpush.msra.mxu0 %v56
  %198 = vmatpush.msra.mxu0 %v54
  %199 = vmatpush.msra.mxu0 %v52
  %200 = vmatpush.msra.mxu0 %v50
  %201 = vmatpush.msra.mxu0 %v48
  %202 = vmatpush.msra.mxu0 %v46
  %203 = vmatpush.msra.mxu0 %v44
  %204 = vmatmul.f32.gmra.mxu0 %v11
  %v205 = vpop.f32.mrf.mxu0
  %v206 = vadd.f32 0.0, %v205
  %207 = vmatmul.f32.gmra.mxu0 %v12
  %v208 = vpop.f32.mrf.mxu0
  %v209 = vadd.f32 0.0, %v208
  %210 = vmatmul.f32.gmra.mxu0 %v13
  %v211 = vpop.f32.mrf.mxu0
  %v212 = vadd.f32 0.0, %v211
  %213 = vmatmul.f32.gmra.mxu0 %v14
  %v214 = vpop.f32.mrf.mxu0
  %v215 = vadd.f32 0.0, %v214
  %216 = vmatmul.f32.gmra.mxu0 %v15
  %v217 = vpop.f32.mrf.mxu0
  %v218 = vadd.f32 0.0, %v217
  %219 = vmatmul.f32.gmra.mxu0 %v16
  %v220 = vpop.f32.mrf.mxu0
  %v221 = vadd.f32 0.0, %v220
  %222 = vmatmul.f32.gmra.mxu0 %v17
  %v223 = vpop.f32.mrf.mxu0
  %v224 = vadd.f32 0.0, %v223
  %225 = vmatmul.f32.gmra.mxu0 %v18
  %v226 = vpop.f32.mrf.mxu0
  %v227 = vadd.f32 0.0, %v226
  %228 = vmatmul.f32.gmra.mxu0 %v19
  %v229 = vpop.f32.mrf.mxu0
  %v230 = vadd.f32 0.0, %v229
  %231 = vmatmul.f32.gmra.mxu0 %v20
  %v232 = vpop.f32.mrf.mxu0
  %v233 = vadd.f32 0.0, %v232
  %234 = vmatmul.f32.gmra.mxu0 %v21
  %v235 = vpop.f32.mrf.mxu0
  %v236 = vadd.f32 0.0, %v235
  %237 = vmatmul.f32.gmra.mxu0 %v22
  %v238 = vpop.f32.mrf.mxu0
  %v239 = vadd.f32 0.0, %v238
  %240 = vmatmul.f32.gmra.mxu0 %v23
  %v241 = vpop.f32.mrf.mxu0
  %v242 = vadd.f32 0.0, %v241
  %243 = vmatmul.f32.gmra.mxu0 %v24
  %v244 = vpop.f32.mrf.mxu0
  %v245 = vadd.f32 0.0, %v244
  %246 = vmatmul.f32.gmra.mxu0 %v25
  %v247 = vpop.f32.mrf.mxu0
  %v248 = vadd.f32 0.0, %v247
  %249 = vmatmul.f32.gmra.mxu0 %v26
  %v250 = vpop.f32.mrf.mxu0
  %v251 = vadd.f32 0.0, %v250
  %252 = vmatmul.f32.gmra.mxu0 %v27
  %v253 = vpop.f32.mrf.mxu0
  %v254 = vadd.f32 0.0, %v253
  %255 = vmatmul.f32.gmra.mxu0 %v28
  %v256 = vpop.f32.mrf.mxu0
  %v257 = vadd.f32 0.0, %v256
  %258 = vmatmul.f32.gmra.mxu0 %v29
  %v259 = vpop.f32.mrf.mxu0
  %v260 = vadd.f32 0.0, %v259
  %261 = vmatmul.f32.gmra.mxu0 %v30
  %v262 = vpop.f32.mrf.mxu0
  %v263 = vadd.f32 0.0, %v262
  %264 = vmatmul.f32.gmra.mxu0 %v31
  %v265 = vpop.f32.mrf.mxu0
  %v266 = vadd.f32 0.0, %v265
  %267 = vmatmul.f32.gmra.mxu0 %v32
  %v268 = vpop.f32.mrf.mxu0
  %v269 = vadd.f32 0.0, %v268
  %270 = vmatmul.f32.gmra.mxu0 %v33
  %v271 = vpop.f32.mrf.mxu0
  %v272 = vadd.f32 0.0, %v271
  %273 = vmatmul.f32.gmra.mxu0 %v34
  %v274 = vpop.f32.mrf.mxu0
  %v275 = vadd.f32 0.0, %v274
  %276 = vmatmul.f32.gmra.mxu0 %v35
  %v277 = vpop.f32.mrf.mxu0
  %v278 = vadd.f32 0.0, %v277
  %279 = vmatmul.f32.gmra.mxu0 %v36
  %v280 = vpop.f32.mrf.mxu0
  %v281 = vadd.f32 0.0, %v280
  %282 = vmatmul.f32.gmra.mxu0 %v37
  %v283 = vpop.f32.mrf.mxu0
  %v284 = vadd.f32 0.0, %v283
  %285 = vmatmul.f32.gmra.mxu0 %v38
  %v286 = vpop.f32.mrf.mxu0
  %v287 = vadd.f32 0.0, %v286
  %288 = vmatmul.f32.gmra.mxu0 %v39
  %v289 = vpop.f32.mrf.mxu0
  %v290 = vadd.f32 0.0, %v289
  %291 = vmatmul.f32.gmra.mxu0 %v40
  %v292 = vpop.f32.mrf.mxu0
  %v293 = vadd.f32 0.0, %v292
  %294 = vmatmul.f32.gmra.mxu0 %v41
  %v295 = vpop.f32.mrf.mxu0
  %v296 = vadd.f32 0.0, %v295
  %297 = vmatmul.f32.gmra.mxu0 %v42
  %v298 = vpop.f32.mrf.mxu0
  %v299 = vadd.f32 0.0, %v298
  %300 = vdwg.mxu0
  %301 = vst [vmem:[%s2] sm:$0xff] %v93
  %302 = vst [vmem:[%s2 + $0x8] sm:$0xff] %v206
  %303 = vst [vmem:[%s2 + $0x10] sm:$0xff] %v96
  %304 = vst [vmem:[%s2 + $0x18] sm:$0xff] %v209
  %305 = vst [vmem:[%s2 + $0x20] sm:$0xff] %v99
  %306 = vst [vmem:[%s2 + $0x28] sm:$0xff] %v212
  %307 = vst [vmem:[%s2 + $0x30] sm:$0xff] %v102
  %308 = vst [vmem:[%s2 + $0x38] sm:$0xff] %v215
  %309 = vst [vmem:[%s2 + $0x40] sm:$0xff] %v105
  %310 = vst [vmem:[%s2 + $0x48] sm:$0xff] %v218
  %311 = vst [vmem:[%s2 + $0x50] sm:$0xff] %v108
  %312 = vst [vmem:[%s2 + $0x58] sm:$0xff] %v221
  %313 = vst [vmem:[%s2 + $0x60] sm:$0xff] %v111
  %314 = vst [vmem:[%s2 + $0x68] sm:$0xff] %v224
  %315 = vst [vmem:[%s2 + $0x70] sm:$0xff] %v114
  %316 = vst [vmem:[%s2 + $0x78] sm:$0xff] %v227
  %317 = vst [vmem:[%s2 + $0x80] sm:$0xff] %v117
  %318 = vst [vmem:[%s2 + $0x88] sm:$0xff] %v230
  %319 = vst [vmem:[%s2 + $0x90] sm:$0xff] %v120
  %320 = vst [vmem:[%s2 + $0x98] sm:$0xff] %v233
  %321 = vst [vmem:[%s2 + $0xa0] sm:$0xff] %v123
  %322 = vst [vmem:[%s2 + $0xa8] sm:$0xff] %v236
  %323 = vst [vmem:[%s2 + $0xb0] sm:$0xff] %v126
  %324 = vst [vmem:[%s2 + $0xb8] sm:$0xff] %v239
  %325 = vst [vmem:[%s2 + $0xc0] sm:$0xff] %v129
  %326 = vst [vmem:[%s2 + $0xc8] sm:$0xff] %v242
  %327 = vst [vmem:[%s2 + $0xd0] sm:$0xff] %v132
  %328 = vst [vmem:[%s2 + $0xd8] sm:$0xff] %v245
  %329 = vst [vmem:[%s2 + $0xe0] sm:$0xff] %v135
  %330 = vst [vmem:[%s2 + $0xe8] sm:$0xff] %v248
  %331 = vst [vmem:[%s2 + $0xf0] sm:$0xff] %v138
  %332 = vst [vmem:[%s2 + $0xf8] sm:$0xff] %v251
  %333 = vst [vmem:[%s2 + $0x100] sm:$0xff] %v141
  %334 = vst [vmem:[%s2 + $0x108] sm:$0xff] %v254
  %335 = vst [vmem:[%s2 + $0x110] sm:$0xff] %v144
  %336 = vst [vmem:[%s2 + $0x118] sm:$0xff] %v257
  %337 = vst [vmem:[%s2 + $0x120] sm:$0xff] %v147
  %338 = vst [vmem:[%s2 + $0x128] sm:$0xff] %v260
  %339 = vst [vmem:[%s2 + $0x130] sm:$0xff] %v150
  %340 = vst [vmem:[%s2 + $0x138] sm:$0xff] %v263
  %341 = vst [vmem:[%s2 + $0x140] sm:$0xff] %v153
  %342 = vst [vmem:[%s2 + $0x148] sm:$0xff] %v266
  %343 = vst [vmem:[%s2 + $0x150] sm:$0xff] %v156
  %344 = vst [vmem:[%s2 + $0x158] sm:$0xff] %v269
  %345 = vst [vmem:[%s2 + $0x160] sm:$0xff] %v159
  %346 = vst [vmem:[%s2 + $0x168] sm:$0xff] %v272
  %347 = vst [vmem:[%s2 + $0x170] sm:$0xff] %v162
  %348 = vst [vmem:[%s2 + $0x178] sm:$0xff] %v275
  %349 = vst [vmem:[%s2 + $0x180] sm:$0xff] %v165
  %350 = vst [vmem:[%s2 + $0x188] sm:$0xff] %v278
  %351 = vst [vmem:[%s2 + $0x190] sm:$0xff] %v168
  %352 = vst [vmem:[%s2 + $0x198] sm:$0xff] %v281
  %353 = vst [vmem:[%s2 + $0x1a0] sm:$0xff] %v171
  %354 = vst [vmem:[%s2 + $0x1a8] sm:$0xff] %v284
  %355 = vst [vmem:[%s2 + $0x1b0] sm:$0xff] %v174
  %356 = vst [vmem:[%s2 + $0x1b8] sm:$0xff] %v287
  %357 = vst [vmem:[%s2 + $0x1c0] sm:$0xff] %v177
  %358 = vst [vmem:[%s2 + $0x1c8] sm:$0xff] %v290
  %359 = vst [vmem:[%s2 + $0x1d0] sm:$0xff] %v180
  %360 = vst [vmem:[%s2 + $0x1d8] sm:$0xff] %v293
  %361 = vst [vmem:[%s2 + $0x1e0] sm:$0xff] %v183
  %362 = vst [vmem:[%s2 + $0x1e8] sm:$0xff] %v296
  %363 = vst [vmem:[%s2 + $0x1f0] sm:$0xff] %v186
  %364 = vst [vmem:[%s2 + $0x1f8] sm:$0xff] %v299
  // Predicated region
  $region10: #{resblock_forward.2} parent=0 // pred_check
    _
  $region11: #{resblock_forward.2} parent=0 // pred_check_branch
    %366 = sbr.rel (0) target = $region13
  $region12: #{resblock_forward.2} parent=0 // pred_region
    _
  $region13: #{resblock_forward.2} parent=0 // pred_fallthru
    _
  // Predicated region
  $region14: #{resblock_forward.2} parent=0 // pred_check
    _
  $region15: #{resblock_forward.2} parent=0 // pred_check_branch
    %368 = sbr.rel (0) target = $region17
  $region16: #{resblock_forward.2} parent=0 // pred_region
    _
  $region17: #{resblock_forward.2} parent=0 // pred_fallthru
    _

// kernel: resblock_forward.3
$region0: #{resblock_forward.3}
  #allocation0 [shape = 'u32[]', space=smem, size = 0x4, offset = 0x4, fixed_abs, tag = 'smem constant byte address 0x4 - core index']
  #allocation1 [shape = 'u32[72,128]{1,0:T(1,128)}', space=vmem, size = 0x9000, scoped, tag = 'internal scratch']
  #allocation2 [shape = 'f32[256,128]{1,0:T(8,128)}', space=vmem, size = 0x20000, scoped, tag = 'scratch operand']
  %s0 = inlined_call_operand.vmem [shape: f32[256,256], index: 0, kind: input, shape index: {}]
  %s1 = inlined_call_operand.vmem [shape: f32[256,128], index: 1, kind: input, shape index: {}]
  %s2 = inlined_call_operand.vmem [shape: f32[1,128], index: 2, kind: input, shape index: {}]
  %s3 = inlined_call_operand.vmem [shape: f32[256,128], index: 3, kind: input, shape index: {}]
  %s4 = inlined_call_operand.vmem [shape: f32[256,128], index: 4, kind: output, shape index: {}]
  %s5 = sld [smem:[#allocation0]]
  $region34: #{resblock_forward.3} parent=0
    _
  %s7 = ssub.s32 1, %s5
  %s8 = scalar_select 0, %s7, %s5
  // Predicated region
  $region2: #{resblock_forward.3} parent=0 // pred_check
    _
  $region3: #{resblock_forward.3} parent=0 // pred_check_branch
    %10 = sbr.rel (0) target = $region5
  $region4: #{resblock_forward.3} parent=0 // pred_region
    _
  $region5: #{resblock_forward.3} parent=0 // pred_fallthru
    _
  // Predicated region
  $region6: #{resblock_forward.3} parent=0 // pred_check
    _
  $region7: #{resblock_forward.3} parent=0 // pred_check_branch
    %12 = sbr.rel (0) target = $region9
  $region8: #{resblock_forward.3} parent=0 // pred_region
    _
  $region9: #{resblock_forward.3} parent=0 // pred_fallthru
    _
  // Predicated region
  $region10: #{resblock_forward.3} parent=0 // pred_check
    _
  $region11: #{resblock_forward.3} parent=0 // pred_check_branch
    %14 = sbr.rel (0) target = $region13
  $region12: #{resblock_forward.3} parent=0 // pred_region
    _
  $region13: #{resblock_forward.3} parent=0 // pred_fallthru
    _
  // Predicated region
  $region14: #{resblock_forward.3} parent=0 // pred_check
    _
  $region15: #{resblock_forward.3} parent=0 // pred_check_branch
    %16 = sbr.rel (0) target = $region17
  $region16: #{resblock_forward.3} parent=0 // pred_region
    _
  $region17: #{resblock_forward.3} parent=0 // pred_fallthru
    _
  %p17 = scmp.eq.s32.totalorder 0, 0
  // Predicated region
  $region18: #{resblock_forward.3} parent=0 // pred_check
    %p18 = pneg %p17
  $region19: #{resblock_forward.3} parent=0 // pred_check_branch
    %20 = sbr.rel (%p18) target = $region21
  $region20: #{resblock_forward.3} parent=0 // pred_region
    %21 = vst [vmem:[#allocation2] sm:$0xff] 0.0
    %22 = vst [vmem:[#allocation2 + $0x8] sm:$0xff] 0.0
    %23 = vst [vmem:[#allocation2 + $0x10] sm:$0xff] 0.0
    %24 = vst [vmem:[#allocation2 + $0x18] sm:$0xff] 0.0
    %25 = vst [vmem:[#allocation2 + $0x20] sm:$0xff] 0.0
    %26 = vst [vmem:[#allocation2 + $0x28] sm:$0xff] 0.0
    %27 = vst [vmem:[#allocation2 + $0x30] sm:$0xff] 0.0
    %28 = vst [vmem:[#allocation2 + $0x38] sm:$0xff] 0.0
    %29 = vst [vmem:[#allocation2 + $0x40] sm:$0xff] 0.0
    %30 = vst [vmem:[#allocation2 + $0x48] sm:$0xff] 0.0
    %31 = vst [vmem:[#allocation2 + $0x50] sm:$0xff] 0.0
    %32 = vst [vmem:[#allocation2 + $0x58] sm:$0xff] 0.0
    %33 = vst [vmem:[#allocation2 + $0x60] sm:$0xff] 0.0
    %34 = vst [vmem:[#allocation2 + $0x68] sm:$0xff] 0.0
    %35 = vst [vmem:[#allocation2 + $0x70] sm:$0xff] 0.0
    %36 = vst [vmem:[#allocation2 + $0x78] sm:$0xff] 0.0
    %37 = vst [vmem:[#allocation2 + $0x80] sm:$0xff] 0.0
    %38 = vst [vmem:[#allocation2 + $0x88] sm:$0xff] 0.0
    %39 = vst [vmem:[#allocation2 + $0x90] sm:$0xff] 0.0
    %40 = vst [vmem:[#allocation2 + $0x98] sm:$0xff] 0.0
    %41 = vst [vmem:[#allocation2 + $0xa0] sm:$0xff] 0.0
    %42 = vst [vmem:[#allocation2 + $0xa8] sm:$0xff] 0.0
    %43 = vst [vmem:[#allocation2 + $0xb0] sm:$0xff] 0.0
    %44 = vst [vmem:[#allocation2 + $0xb8] sm:$0xff] 0.0
    %45 = vst [vmem:[#allocation2 + $0xc0] sm:$0xff] 0.0
    %46 = vst [vmem:[#allocation2 + $0xc8] sm:$0xff] 0.0
    %47 = vst [vmem:[#allocation2 + $0xd0] sm:$0xff] 0.0
    %48 = vst [vmem:[#allocation2 + $0xd8] sm:$0xff] 0.0
    %49 = vst [vmem:[#allocation2 + $0xe0] sm:$0xff] 0.0
    %50 = vst [vmem:[#allocation2 + $0xe8] sm:$0xff] 0.0
    %51 = vst [vmem:[#allocation2 + $0xf0] sm:$0xff] 0.0
    %52 = vst [vmem:[#allocation2 + $0xf8] sm:$0xff] 0.0
  $region21: #{resblock_forward.3} parent=0 // pred_fallthru
    _
  %v53 = vld [vmem:[#allocation2] sm:$0xff]
  %v54 = vld [vmem:[#allocation2 + $0x8] sm:$0xff]
  %v55 = vld [vmem:[#allocation2 + $0x10] sm:$0xff]
  %v56 = vld [vmem:[#allocation2 + $0x18] sm:$0xff]
  %v57 = vld [vmem:[#allocation2 + $0x20] sm:$0xff]
  %v58 = vld [vmem:[#allocation2 + $0x28] sm:$0xff]
  %v59 = vld [vmem:[#allocation2 + $0x30] sm:$0xff]
  %v60 = vld [vmem:[#allocation2 + $0x38] sm:$0xff]
  %v61 = vld [vmem:[#allocation2 + $0x40] sm:$0xff]
  %v62 = vld [vmem:[#allocation2 + $0x48] sm:$0xff]
  %v63 = vld [vmem:[#allocation2 + $0x50] sm:$0xff]
  %v64 = vld [vmem:[#allocation2 + $0x58] sm:$0xff]
  %v65 = vld [vmem:[#allocation2 + $0x60] sm:$0xff]
  %v66 = vld [vmem:[#allocation2 + $0x68] sm:$0xff]
  %v67 = vld [vmem:[#allocation2 + $0x70] sm:$0xff]
  %v68 = vld [vmem:[#allocation2 + $0x78] sm:$0xff]
  %v69 = vld [vmem:[#allocation2 + $0x80] sm:$0xff]
  %v70 = vld [vmem:[#allocation2 + $0x88] sm:$0xff]
  %v71 = vld [vmem:[#allocation2 + $0x90] sm:$0xff]
  %v72 = vld [vmem:[#allocation2 + $0x98] sm:$0xff]
  %v73 = vld [vmem:[#allocation2 + $0xa0] sm:$0xff]
  %v74 = vld [vmem:[#allocation2 + $0xa8] sm:$0xff]
  %v75 = vld [vmem:[#allocation2 + $0xb0] sm:$0xff]
  %v76 = vld [vmem:[#allocation2 + $0xb8] sm:$0xff]
  %v77 = vld [vmem:[#allocation2 + $0xc0] sm:$0xff]
  %v78 = vld [vmem:[#allocation2 + $0xc8] sm:$0xff]
  %v79 = vld [vmem:[#allocation2 + $0xd0] sm:$0xff]
  %v80 = vld [vmem:[#allocation2 + $0xd8] sm:$0xff]
  %v81 = vld [vmem:[#allocation2 + $0xe0] sm:$0xff]
  %v82 = vld [vmem:[#allocation2 + $0xe8] sm:$0xff]
  %v83 = vld [vmem:[#allocation2 + $0xf0] sm:$0xff]
  %v84 = vld [vmem:[#allocation2 + $0xf8] sm:$0xff]
  %v85 = vld [vmem:[%s0] sm:$0xff]
  %v86 = vld [vmem:[%s0 + $0x8] sm:$0xff]
  %v87 = vld [vmem:[%s0 + $0x10] sm:$0xff]
  %v88 = vld [vmem:[%s0 + $0x18] sm:$0xff]
  %v89 = vld [vmem:[%s0 + $0x20] sm:$0xff]
  %v90 = vld [vmem:[%s0 + $0x28] sm:$0xff]
  %v91 = vld [vmem:[%s0 + $0x30] sm:$0xff]
  %v92 = vld [vmem:[%s0 + $0x38] sm:$0xff]
  %v93 = vld [vmem:[%s0 + $0x40] sm:$0xff]
  %v94 = vld [vmem:[%s0 + $0x48] sm:$0xff]
  %v95 = vld [vmem:[%s0 + $0x50] sm:$0xff]
  %v96 = vld [vmem:[%s0 + $0x58] sm:$0xff]
  %v97 = vld [vmem:[%s0 + $0x60] sm:$0xff]
  %v98 = vld [vmem:[%s0 + $0x68] sm:$0xff]
  %v99 = vld [vmem:[%s0 + $0x70] sm:$0xff]
  %v100 = vld [vmem:[%s0 + $0x78] sm:$0xff]
  %v101 = vld [vmem:[%s0 + $0x80] sm:$0xff]
  %v102 = vld [vmem:[%s0 + $0x88] sm:$0xff]
  %v103 = vld [vmem:[%s0 + $0x90] sm:$0xff]
  %v104 = vld [vmem:[%s0 + $0x98] sm:$0xff]
  %v105 = vld [vmem:[%s0 + $0xa0] sm:$0xff]
  %v106 = vld [vmem:[%s0 + $0xa8] sm:$0xff]
  %v107 = vld [vmem:[%s0 + $0xb0] sm:$0xff]
  %v108 = vld [vmem:[%s0 + $0xb8] sm:$0xff]
  %v109 = vld [vmem:[%s0 + $0xc0] sm:$0xff]
  %v110 = vld [vmem:[%s0 + $0xc8] sm:$0xff]
  %v111 = vld [vmem:[%s0 + $0xd0] sm:$0xff]
  %v112 = vld [vmem:[%s0 + $0xd8] sm:$0xff]
  %v113 = vld [vmem:[%s0 + $0xe0] sm:$0xff]
  %v114 = vld [vmem:[%s0 + $0xe8] sm:$0xff]
  %v115 = vld [vmem:[%s0 + $0xf0] sm:$0xff]
  %v116 = vld [vmem:[%s0 + $0xf8] sm:$0xff]
  %v117 = vld [vmem:[%s0 + $0x100] sm:$0xff]
  %v118 = vld [vmem:[%s0 + $0x108] sm:$0xff]
  %v119 = vld [vmem:[%s0 + $0x110] sm:$0xff]
  %v120 = vld [vmem:[%s0 + $0x118] sm:$0xff]
  %v121 = vld [vmem:[%s0 + $0x120] sm:$0xff]
  %v122 = vld [vmem:[%s0 + $0x128] sm:$0xff]
  %v123 = vld [vmem:[%s0 + $0x130] sm:$0xff]
  %v124 = vld [vmem:[%s0 + $0x138] sm:$0xff]
  %v125 = vld [vmem:[%s0 + $0x140] sm:$0xff]
  %v126 = vld [vmem:[%s0 + $0x148] sm:$0xff]
  %v127 = vld [vmem:[%s0 + $0x150] sm:$0xff]
  %v128 = vld [vmem:[%s0 + $0x158] sm:$0xff]
  %v129 = vld [vmem:[%s0 + $0x160] sm:$0xff]
  %v130 = vld [vmem:[%s0 + $0x168] sm:$0xff]
  %v131 = vld [vmem:[%s0 + $0x170] sm:$0xff]
  %v132 = vld [vmem:[%s0 + $0x178] sm:$0xff]
  %v133 = vld [vmem:[%s0 + $0x180] sm:$0xff]
  %v134 = vld [vmem:[%s0 + $0x188] sm:$0xff]
  %v135 = vld [vmem:[%s0 + $0x190] sm:$0xff]
  %v136 = vld [vmem:[%s0 + $0x198] sm:$0xff]
  %v137 = vld [vmem:[%s0 + $0x1a0] sm:$0xff]
  %v138 = vld [vmem:[%s0 + $0x1a8] sm:$0xff]
  %v139 = vld [vmem:[%s0 + $0x1b0] sm:$0xff]
  %v140 = vld [vmem:[%s0 + $0x1b8] sm:$0xff]
  %v141 = vld [vmem:[%s0 + $0x1c0] sm:$0xff]
  %v142 = vld [vmem:[%s0 + $0x1c8] sm:$0xff]
  %v143 = vld [vmem:[%s0 + $0x1d0] sm:$0xff]
  %v144 = vld [vmem:[%s0 + $0x1d8] sm:$0xff]
  %v145 = vld [vmem:[%s0 + $0x1e0] sm:$0xff]
  %v146 = vld [vmem:[%s0 + $0x1e8] sm:$0xff]
  %v147 = vld [vmem:[%s0 + $0x1f0] sm:$0xff]
  %v148 = vld [vmem:[%s0 + $0x1f8] sm:$0xff]
  %v149 = vld [vmem:[%s1] sm:$0xff]
  %v150 = vld [vmem:[%s1 + $0x8] sm:$0xff]
  %v151 = vld [vmem:[%s1 + $0x10] sm:$0xff]
  %v152 = vld [vmem:[%s1 + $0x18] sm:$0xff]
  %v153 = vld [vmem:[%s1 + $0x20] sm:$0xff]
  %v154 = vld [vmem:[%s1 + $0x28] sm:$0xff]
  %v155 = vld [vmem:[%s1 + $0x30] sm:$0xff]
  %v156 = vld [vmem:[%s1 + $0x38] sm:$0xff]
  %v157 = vld [vmem:[%s1 + $0x40] sm:$0xff]
  %v158 = vld [vmem:[%s1 + $0x48] sm:$0xff]
  %v159 = vld [vmem:[%s1 + $0x50] sm:$0xff]
  %v160 = vld [vmem:[%s1 + $0x58] sm:$0xff]
  %v161 = vld [vmem:[%s1 + $0x60] sm:$0xff]
  %v162 = vld [vmem:[%s1 + $0x68] sm:$0xff]
  %v163 = vld [vmem:[%s1 + $0x70] sm:$0xff]
  %v164 = vld [vmem:[%s1 + $0x78] sm:$0xff]
  %v165 = vld [vmem:[%s1 + $0x80] sm:$0xff]
  %v166 = vld [vmem:[%s1 + $0x88] sm:$0xff]
  %v167 = vld [vmem:[%s1 + $0x90] sm:$0xff]
  %v168 = vld [vmem:[%s1 + $0x98] sm:$0xff]
  %v169 = vld [vmem:[%s1 + $0xa0] sm:$0xff]
  %v170 = vld [vmem:[%s1 + $0xa8] sm:$0xff]
  %v171 = vld [vmem:[%s1 + $0xb0] sm:$0xff]
  %v172 = vld [vmem:[%s1 + $0xb8] sm:$0xff]
  %v173 = vld [vmem:[%s1 + $0xc0] sm:$0xff]
  %v174 = vld [vmem:[%s1 + $0xc8] sm:$0xff]
  %v175 = vld [vmem:[%s1 + $0xd0] sm:$0xff]
  %v176 = vld [vmem:[%s1 + $0xd8] sm:$0xff]
  %v177 = vld [vmem:[%s1 + $0xe0] sm:$0xff]
  %v178 = vld [vmem:[%s1 + $0xe8] sm:$0xff]
  %v179 = vld [vmem:[%s1 + $0xf0] sm:$0xff]
  %v180 = vld [vmem:[%s1 + $0xf8] sm:$0xff]
  %181 = vmatpush.msra.mxu0 %v164
  %182 = vmatpush.msra.mxu0 %v163
  %183 = vmatpush.msra.mxu0 %v162
  %184 = vmatpush.msra.mxu0 %v161
  %185 = vmatpush.msra.mxu0 %v160
  %186 = vmatpush.msra.mxu0 %v159
  %187 = vmatpush.msra.mxu0 %v158
  %188 = vmatpush.msra.mxu0 %v157
  %189 = vmatpush.msra.mxu0 %v156
  %190 = vmatpush.msra.mxu0 %v155
  %191 = vmatpush.msra.mxu0 %v154
  %192 = vmatpush.msra.mxu0 %v153
  %193 = vmatpush.msra.mxu0 %v152
  %194 = vmatpush.msra.mxu0 %v151
  %195 = vmatpush.msra.mxu0 %v150
  %196 = vmatpush.msra.mxu0 %v149
  %197 = vmatmul.f32.gmra.mxu0 %v85
  %v198 = vpop.f32.mrf.mxu0
  %v199 = vadd.f32 0.0, %v198
  %200 = vmatmul.f32.gmra.mxu0 %v87
  %v201 = vpop.f32.mrf.mxu0
  %v202 = vadd.f32 0.0, %v201
  %203 = vmatmul.f32.gmra.mxu0 %v89
  %v204 = vpop.f32.mrf.mxu0
  %v205 = vadd.f32 0.0, %v204
  %206 = vmatmul.f32.gmra.mxu0 %v91
  %v207 = vpop.f32.mrf.mxu0
  %v208 = vadd.f32 0.0, %v207
  %209 = vmatmul.f32.gmra.mxu0 %v93
  %v210 = vpop.f32.mrf.mxu0
  %v211 = vadd.f32 0.0, %v210
  %212 = vmatmul.f32.gmra.mxu0 %v95
  %v213 = vpop.f32.mrf.mxu0
  %v214 = vadd.f32 0.0, %v213
  %215 = vmatmul.f32.gmra.mxu0 %v97
  %v216 = vpop.f32.mrf.mxu0
  %v217 = vadd.f32 0.0, %v216
  %218 = vmatmul.f32.gmra.mxu0 %v99
  %v219 = vpop.f32.mrf.mxu0
  %v220 = vadd.f32 0.0, %v219
  %221 = vmatmul.f32.gmra.mxu0 %v101
  %v222 = vpop.f32.mrf.mxu0
  %v223 = vadd.f32 0.0, %v222
  %224 = vmatmul.f32.gmra.mxu0 %v103
  %v225 = vpop.f32.mrf.mxu0
  %v226 = vadd.f32 0.0, %v225
  %227 = vmatmul.f32.gmra.mxu0 %v105
  %v228 = vpop.f32.mrf.mxu0
  %v229 = vadd.f32 0.0, %v228
  %230 = vmatmul.f32.gmra.mxu0 %v107
  %v231 = vpop.f32.mrf.mxu0
  %v232 = vadd.f32 0.0, %v231
  %233 = vmatmul.f32.gmra.mxu0 %v109
  %v234 = vpop.f32.mrf.mxu0
  %v235 = vadd.f32 0.0, %v234
  %236 = vmatmul.f32.gmra.mxu0 %v111
  %v237 = vpop.f32.mrf.mxu0
  %v238 = vadd.f32 0.0, %v237
  %239 = vmatmul.f32.gmra.mxu0 %v113
  %v240 = vpop.f32.mrf.mxu0
  %v241 = vadd.f32 0.0, %v240
  %242 = vmatmul.f32.gmra.mxu0 %v115
  %v243 = vpop.f32.mrf.mxu0
  %v244 = vadd.f32 0.0, %v243
  %245 = vmatmul.f32.gmra.mxu0 %v117
  %v246 = vpop.f32.mrf.mxu0
  %v247 = vadd.f32 0.0, %v246
  %248 = vmatmul.f32.gmra.mxu0 %v119
  %v249 = vpop.f32.mrf.mxu0
  %v250 = vadd.f32 0.0, %v249
  %251 = vmatmul.f32.gmra.mxu0 %v121
  %v252 = vpop.f32.mrf.mxu0
  %v253 = vadd.f32 0.0, %v252
  %254 = vmatmul.f32.gmra.mxu0 %v123
  %v255 = vpop.f32.mrf.mxu0
  %v256 = vadd.f32 0.0, %v255
  %257 = vmatmul.f32.gmra.mxu0 %v125
  %v258 = vpop.f32.mrf.mxu0
  %v259 = vadd.f32 0.0, %v258
  %260 = vmatmul.f32.gmra.mxu0 %v127
  %v261 = vpop.f32.mrf.mxu0
  %v262 = vadd.f32 0.0, %v261
  %263 = vmatmul.f32.gmra.mxu0 %v129
  %v264 = vpop.f32.mrf.mxu0
  %v265 = vadd.f32 0.0, %v264
  %266 = vmatmul.f32.gmra.mxu0 %v131
  %v267 = vpop.f32.mrf.mxu0
  %v268 = vadd.f32 0.0, %v267
  %269 = vmatmul.f32.gmra.mxu0 %v133
  %v270 = vpop.f32.mrf.mxu0
  %v271 = vadd.f32 0.0, %v270
  %272 = vmatmul.f32.gmra.mxu0 %v135
  %v273 = vpop.f32.mrf.mxu0
  %v274 = vadd.f32 0.0, %v273
  %275 = vmatmul.f32.gmra.mxu0 %v137
  %v276 = vpop.f32.mrf.mxu0
  %v277 = vadd.f32 0.0, %v276
  %278 = vmatmul.f32.gmra.mxu0 %v139
  %v279 = vpop.f32.mrf.mxu0
  %v280 = vadd.f32 0.0, %v279
  %281 = vmatmul.f32.gmra.mxu0 %v141
  %v282 = vpop.f32.mrf.mxu0
  %v283 = vadd.f32 0.0, %v282
  %284 = vmatmul.f32.gmra.mxu0 %v143
  %v285 = vpop.f32.mrf.mxu0
  %v286 = vadd.f32 0.0, %v285
  %287 = vmatmul.f32.gmra.mxu0 %v145
  %v288 = vpop.f32.mrf.mxu0
  %v289 = vadd.f32 0.0, %v288
  %290 = vmatmul.f32.gmra.mxu0 %v147
  %v291 = vpop.f32.mrf.mxu0
  %v292 = vadd.f32 0.0, %v291
  %293 = vdwg.mxu0
  %294 = vmatpush.msra.mxu0 %v180
  %295 = vmatpush.msra.mxu0 %v179
  %296 = vmatpush.msra.mxu0 %v178
  %297 = vmatpush.msra.mxu0 %v177
  %298 = vmatpush.msra.mxu0 %v176
  %299 = vmatpush.msra.mxu0 %v175
  %300 = vmatpush.msra.mxu0 %v174
  %301 = vmatpush.msra.mxu0 %v173
  %302 = vmatpush.msra.mxu0 %v172
  %303 = vmatpush.msra.mxu0 %v171
  %304 = vmatpush.msra.mxu0 %v170
  %305 = vmatpush.msra.mxu0 %v169
  %306 = vmatpush.msra.mxu0 %v168
  %307 = vmatpush.msra.mxu0 %v167
  %308 = vmatpush.msra.mxu0 %v166
  %309 = vmatpush.msra.mxu0 %v165
  %310 = vmatmul.f32.gmra.mxu0 %v86
  %v311 = vpop.f32.mrf.mxu0
  %v312 = vadd.f32 %v199, %v311
  %313 = vmatmul.f32.gmra.mxu0 %v88
  %v314 = vpop.f32.mrf.mxu0
  %v315 = vadd.f32 %v202, %v314
  %316 = vmatmul.f32.gmra.mxu0 %v90
  %v317 = vpop.f32.mrf.mxu0
  %v318 = vadd.f32 %v205, %v317
  %319 = vmatmul.f32.gmra.mxu0 %v92
  %v320 = vpop.f32.mrf.mxu0
  %v321 = vadd.f32 %v208, %v320
  %322 = vmatmul.f32.gmra.mxu0 %v94
  %v323 = vpop.f32.mrf.mxu0
  %v324 = vadd.f32 %v211, %v323
  %325 = vmatmul.f32.gmra.mxu0 %v96
  %v326 = vpop.f32.mrf.mxu0
  %v327 = vadd.f32 %v214, %v326
  %328 = vmatmul.f32.gmra.mxu0 %v98
  %v329 = vpop.f32.mrf.mxu0
  %v330 = vadd.f32 %v217, %v329
  %331 = vmatmul.f32.gmra.mxu0 %v100
  %v332 = vpop.f32.mrf.mxu0
  %v333 = vadd.f32 %v220, %v332
  %334 = vmatmul.f32.gmra.mxu0 %v102
  %v335 = vpop.f32.mrf.mxu0
  %v336 = vadd.f32 %v223, %v335
  %337 = vmatmul.f32.gmra.mxu0 %v104
  %v338 = vpop.f32.mrf.mxu0
  %v339 = vadd.f32 %v226, %v338
  %340 = vmatmul.f32.gmra.mxu0 %v106
  %v341 = vpop.f32.mrf.mxu0
  %v342 = vadd.f32 %v229, %v341
  %343 = vmatmul.f32.gmra.mxu0 %v108
  %v344 = vpop.f32.mrf.mxu0
  %v345 = vadd.f32 %v232, %v344
  %346 = vmatmul.f32.gmra.mxu0 %v110
  %v347 = vpop.f32.mrf.mxu0
  %v348 = vadd.f32 %v235, %v347
  %349 = vmatmul.f32.gmra.mxu0 %v112
  %v350 = vpop.f32.mrf.mxu0
  %v351 = vadd.f32 %v238, %v350
  %352 = vmatmul.f32.gmra.mxu0 %v114
  %v353 = vpop.f32.mrf.mxu0
  %v354 = vadd.f32 %v241, %v353
  %355 = vmatmul.f32.gmra.mxu0 %v116
  %v356 = vpop.f32.mrf.mxu0
  %v357 = vadd.f32 %v244, %v356
  %358 = vmatmul.f32.gmra.mxu0 %v118
  %v359 = vpop.f32.mrf.mxu0
  %v360 = vadd.f32 %v247, %v359
  %361 = vmatmul.f32.gmra.mxu0 %v120
  %v362 = vpop.f32.mrf.mxu0
  %v363 = vadd.f32 %v250, %v362
  %364 = vmatmul.f32.gmra.mxu0 %v122
  %v365 = vpop.f32.mrf.mxu0
  %v366 = vadd.f32 %v253, %v365
  %367 = vmatmul.f32.gmra.mxu0 %v124
  %v368 = vpop.f32.mrf.mxu0
  %v369 = vadd.f32 %v256, %v368
  %370 = vmatmul.f32.gmra.mxu0 %v126
  %v371 = vpop.f32.mrf.mxu0
  %v372 = vadd.f32 %v259, %v371
  %373 = vmatmul.f32.gmra.mxu0 %v128
  %v374 = vpop.f32.mrf.mxu0
  %v375 = vadd.f32 %v262, %v374
  %376 = vmatmul.f32.gmra.mxu0 %v130
  %v377 = vpop.f32.mrf.mxu0
  %v378 = vadd.f32 %v265, %v377
  %379 = vmatmul.f32.gmra.mxu0 %v132
  %v380 = vpop.f32.mrf.mxu0
  %v381 = vadd.f32 %v268, %v380
  %382 = vmatmul.f32.gmra.mxu0 %v134
  %v383 = vpop.f32.mrf.mxu0
  %v384 = vadd.f32 %v271, %v383
  %385 = vmatmul.f32.gmra.mxu0 %v136
  %v386 = vpop.f32.mrf.mxu0
  %v387 = vadd.f32 %v274, %v386
  %388 = vmatmul.f32.gmra.mxu0 %v138
  %v389 = vpop.f32.mrf.mxu0
  %v390 = vadd.f32 %v277, %v389
  %391 = vmatmul.f32.gmra.mxu0 %v140
  %v392 = vpop.f32.mrf.mxu0
  %v393 = vadd.f32 %v280, %v392
  %394 = vmatmul.f32.gmra.mxu0 %v142
  %v395 = vpop.f32.mrf.mxu0
  %v396 = vadd.f32 %v283, %v395
  %397 = vmatmul.f32.gmra.mxu0 %v144
  %v398 = vpop.f32.mrf.mxu0
  %v399 = vadd.f32 %v286, %v398
  %400 = vmatmul.f32.gmra.mxu0 %v146
  %v401 = vpop.f32.mrf.mxu0
  %v402 = vadd.f32 %v289, %v401
  %403 = vmatmul.f32.gmra.mxu0 %v148
  %v404 = vpop.f32.mrf.mxu0
  %v405 = vadd.f32 %v292, %v404
  %406 = vdwg.mxu0
  %v407 = vadd.f32 %v53, %v312
  %v408 = vadd.f32 %v54, %v315
  %v409 = vadd.f32 %v55, %v318
  %v410 = vadd.f32 %v56, %v321
  %v411 = vadd.f32 %v57, %v324
  %v412 = vadd.f32 %v58, %v327
  %v413 = vadd.f32 %v59, %v330
  %v414 = vadd.f32 %v60, %v333
  %v415 = vadd.f32 %v61, %v336
  %v416 = vadd.f32 %v62, %v339
  %v417 = vadd.f32 %v63, %v342
  %v418 = vadd.f32 %v64, %v345
  %v419 = vadd.f32 %v65, %v348
  %v420 = vadd.f32 %v66, %v351
  %v421 = vadd.f32 %v67, %v354
  %v422 = vadd.f32 %v68, %v357
  %v423 = vadd.f32 %v69, %v360
  %v424 = vadd.f32 %v70, %v363
  %v425 = vadd.f32 %v71, %v366
  %v426 = vadd.f32 %v72, %v369
  %v427 = vadd.f32 %v73, %v372
  %v428 = vadd.f32 %v74, %v375
  %v429 = vadd.f32 %v75, %v378
  %v430 = vadd.f32 %v76, %v381
  %v431 = vadd.f32 %v77, %v384
  %v432 = vadd.f32 %v78, %v387
  %v433 = vadd.f32 %v79, %v390
  %v434 = vadd.f32 %v80, %v393
  %v435 = vadd.f32 %v81, %v396
  %v436 = vadd.f32 %v82, %v399
  %v437 = vadd.f32 %v83, %v402
  %v438 = vadd.f32 %v84, %v405
  %439 = vst [vmem:[#allocation2] sm:$0xff] %v407
  %440 = vst [vmem:[#allocation2 + $0x8] sm:$0xff] %v408
  %441 = vst [vmem:[#allocation2 + $0x10] sm:$0xff] %v409
  %442 = vst [vmem:[#allocation2 + $0x18] sm:$0xff] %v410
  %443 = vst [vmem:[#allocation2 + $0x20] sm:$0xff] %v411
  %444 = vst [vmem:[#allocation2 + $0x28] sm:$0xff] %v412
  %445 = vst [vmem:[#allocation2 + $0x30] sm:$0xff] %v413
  %446 = vst [vmem:[#allocation2 + $0x38] sm:$0xff] %v414
  %447 = vst [vmem:[#allocation2 + $0x40] sm:$0xff] %v415
  %448 = vst [vmem:[#allocation2 + $0x48] sm:$0xff] %v416
  %449 = vst [vmem:[#allocation2 + $0x50] sm:$0xff] %v417
  %450 = vst [vmem:[#allocation2 + $0x58] sm:$0xff] %v418
  %451 = vst [vmem:[#allocation2 + $0x60] sm:$0xff] %v419
  %452 = vst [vmem:[#allocation2 + $0x68] sm:$0xff] %v420
  %453 = vst [vmem:[#allocation2 + $0x70] sm:$0xff] %v421
  %454 = vst [vmem:[#allocation2 + $0x78] sm:$0xff] %v422
  %455 = vst [vmem:[#allocation2 + $0x80] sm:$0xff] %v423
  %456 = vst [vmem:[#allocation2 + $0x88] sm:$0xff] %v424
  %457 = vst [vmem:[#allocation2 + $0x90] sm:$0xff] %v425
  %458 = vst [vmem:[#allocation2 + $0x98] sm:$0xff] %v426
  %459 = vst [vmem:[#allocation2 + $0xa0] sm:$0xff] %v427
  %460 = vst [vmem:[#allocation2 + $0xa8] sm:$0xff] %v428
  %461 = vst [vmem:[#allocation2 + $0xb0] sm:$0xff] %v429
  %462 = vst [vmem:[#allocation2 + $0xb8] sm:$0xff] %v430
  %463 = vst [vmem:[#allocation2 + $0xc0] sm:$0xff] %v431
  %464 = vst [vmem:[#allocation2 + $0xc8] sm:$0xff] %v432
  %465 = vst [vmem:[#allocation2 + $0xd0] sm:$0xff] %v433
  %466 = vst [vmem:[#allocation2 + $0xd8] sm:$0xff] %v434
  %467 = vst [vmem:[#allocation2 + $0xe0] sm:$0xff] %v435
  %468 = vst [vmem:[#allocation2 + $0xe8] sm:$0xff] %v436
  %469 = vst [vmem:[#allocation2 + $0xf0] sm:$0xff] %v437
  %470 = vst [vmem:[#allocation2 + $0xf8] sm:$0xff] %v438
  // Predicated region
  $region22: #{resblock_forward.3} parent=0 // pred_check
    %p471 = pneg %p17
  $region23: #{resblock_forward.3} parent=0 // pred_check_branch
    %473 = sbr.rel (%p471) target = $region25
  $region24: #{resblock_forward.3} parent=0 // pred_region
    %v474 = vld [vmem:[#allocation2] sm:$0xff]
    %v475 = vld [vmem:[#allocation2 + $0x8] sm:$0xff]
    %v476 = vld [vmem:[#allocation2 + $0x10] sm:$0xff]
    %v477 = vld [vmem:[#allocation2 + $0x18] sm:$0xff]
    %v478 = vld [vmem:[#allocation2 + $0x20] sm:$0xff]
    %v479 = vld [vmem:[#allocation2 + $0x28] sm:$0xff]
    %v480 = vld [vmem:[#allocation2 + $0x30] sm:$0xff]
    %v481 = vld [vmem:[#allocation2 + $0x38] sm:$0xff]
    %v482 = vld [vmem:[#allocation2 + $0x40] sm:$0xff]
    %v483 = vld [vmem:[#allocation2 + $0x48] sm:$0xff]
    %v484 = vld [vmem:[#allocation2 + $0x50] sm:$0xff]
    %v485 = vld [vmem:[#allocation2 + $0x58] sm:$0xff]
    %v486 = vld [vmem:[#allocation2 + $0x60] sm:$0xff]
    %v487 = vld [vmem:[#allocation2 + $0x68] sm:$0xff]
    %v488 = vld [vmem:[#allocation2 + $0x70] sm:$0xff]
    %v489 = vld [vmem:[#allocation2 + $0x78] sm:$0xff]
    %v490 = vld [vmem:[#allocation2 + $0x80] sm:$0xff]
    %v491 = vld [vmem:[#allocation2 + $0x88] sm:$0xff]
    %v492 = vld [vmem:[#allocation2 + $0x90] sm:$0xff]
    %v493 = vld [vmem:[#allocation2 + $0x98] sm:$0xff]
    %v494 = vld [vmem:[#allocation2 + $0xa0] sm:$0xff]
    %v495 = vld [vmem:[#allocation2 + $0xa8] sm:$0xff]
    %v496 = vld [vmem:[#allocation2 + $0xb0] sm:$0xff]
    %v497 = vld [vmem:[#allocation2 + $0xb8] sm:$0xff]
    %v498 = vld [vmem:[#allocation2 + $0xc0] sm:$0xff]
    %v499 = vld [vmem:[#allocation2 + $0xc8] sm:$0xff]
    %v500 = vld [vmem:[#allocation2 + $0xd0] sm:$0xff]
    %v501 = vld [vmem:[#allocation2 + $0xd8] sm:$0xff]
    %v502 = vld [vmem:[#allocation2 + $0xe0] sm:$0xff]
    %v503 = vld [vmem:[#allocation2 + $0xe8] sm:$0xff]
    %v504 = vld [vmem:[#allocation2 + $0xf0] sm:$0xff]
    %v505 = vld [vmem:[#allocation2 + $0xf8] sm:$0xff]
    %v506 = vld [vmem:[%s2] sm:$0x1]
    %v508 = vperm.slane %v506, 0
    %v510 = vadd.f32 %v474, %v508
    %v511 = vadd.f32 %v475, %v508
    %v512 = vadd.f32 %v476, %v508
    %v513 = vadd.f32 %v477, %v508
    %v514 = vadd.f32 %v478, %v508
    %v515 = vadd.f32 %v479, %v508
    %v516 = vadd.f32 %v480, %v508
    %v517 = vadd.f32 %v481, %v508
    %v518 = vadd.f32 %v482, %v508
    %v519 = vadd.f32 %v483, %v508
    %v520 = vadd.f32 %v484, %v508
    %v521 = vadd.f32 %v485, %v508
    %v522 = vadd.f32 %v486, %v508
    %v523 = vadd.f32 %v487, %v508
    %v524 = vadd.f32 %v488, %v508
    %v525 = vadd.f32 %v489, %v508
    %v526 = vadd.f32 %v490, %v508
    %v527 = vadd.f32 %v491, %v508
    %v528 = vadd.f32 %v492, %v508
    %v529 = vadd.f32 %v493, %v508
    %v530 = vadd.f32 %v494, %v508
    %v531 = vadd.f32 %v495, %v508
    %v532 = vadd.f32 %v496, %v508
    %v533 = vadd.f32 %v497, %v508
    %v534 = vadd.f32 %v498, %v508
    %v535 = vadd.f32 %v499, %v508
    %v536 = vadd.f32 %v500, %v508
    %v537 = vadd.f32 %v501, %v508
    %v538 = vadd.f32 %v502, %v508
    %v539 = vadd.f32 %v503, %v508
    %v540 = vadd.f32 %v504, %v508
    %v541 = vadd.f32 %v505, %v508
    %v542 = vmax.f32 %v510, 0.0
    %v543 = vmax.f32 %v511, 0.0
    %v544 = vmax.f32 %v512, 0.0
    %v545 = vmax.f32 %v513, 0.0
    %v546 = vmax.f32 %v514, 0.0
    %v547 = vmax.f32 %v515, 0.0
    %v548 = vmax.f32 %v516, 0.0
    %v549 = vmax.f32 %v517, 0.0
    %v550 = vmax.f32 %v518, 0.0
    %v551 = vmax.f32 %v519, 0.0
    %v552 = vmax.f32 %v520, 0.0
    %v553 = vmax.f32 %v521, 0.0
    %v554 = vmax.f32 %v522, 0.0
    %v555 = vmax.f32 %v523, 0.0
    %v556 = vmax.f32 %v524, 0.0
    %v557 = vmax.f32 %v525, 0.0
    %v558 = vmax.f32 %v526, 0.0
    %v559 = vmax.f32 %v527, 0.0
    %v560 = vmax.f32 %v528, 0.0
    %v561 = vmax.f32 %v529, 0.0
    %v562 = vmax.f32 %v530, 0.0
    %v563 = vmax.f32 %v531, 0.0
    %v564 = vmax.f32 %v532, 0.0
    %v565 = vmax.f32 %v533, 0.0
    %v566 = vmax.f32 %v534, 0.0
    %v567 = vmax.f32 %v535, 0.0
    %v568 = vmax.f32 %v536, 0.0
    %v569 = vmax.f32 %v537, 0.0
    %v570 = vmax.f32 %v538, 0.0
    %v571 = vmax.f32 %v539, 0.0
    %v572 = vmax.f32 %v540, 0.0
    %v573 = vmax.f32 %v541, 0.0
    %v574 = vld [vmem:[%s3] sm:$0xff]
    %v575 = vld [vmem:[%s3 + $0x8] sm:$0xff]
    %v576 = vld [vmem:[%s3 + $0x10] sm:$0xff]
    %v577 = vld [vmem:[%s3 + $0x18] sm:$0xff]
    %v578 = vld [vmem:[%s3 + $0x20] sm:$0xff]
    %v579 = vld [vmem:[%s3 + $0x28] sm:$0xff]
    %v580 = vld [vmem:[%s3 + $0x30] sm:$0xff]
    %v581 = vld [vmem:[%s3 + $0x38] sm:$0xff]
    %v582 = vld [vmem:[%s3 + $0x40] sm:$0xff]
    %v583 = vld [vmem:[%s3 + $0x48] sm:$0xff]
    %v584 = vld [vmem:[%s3 + $0x50] sm:$0xff]
    %v585 = vld [vmem:[%s3 + $0x58] sm:$0xff]
    %v586 = vld [vmem:[%s3 + $0x60] sm:$0xff]
    %v587 = vld [vmem:[%s3 + $0x68] sm:$0xff]
    %v588 = vld [vmem:[%s3 + $0x70] sm:$0xff]
    %v589 = vld [vmem:[%s3 + $0x78] sm:$0xff]
    %v590 = vld [vmem:[%s3 + $0x80] sm:$0xff]
    %v591 = vld [vmem:[%s3 + $0x88] sm:$0xff]
    %v592 = vld [vmem:[%s3 + $0x90] sm:$0xff]
    %v593 = vld [vmem:[%s3 + $0x98] sm:$0xff]
    %v594 = vld [vmem:[%s3 + $0xa0] sm:$0xff]
    %v595 = vld [vmem:[%s3 + $0xa8] sm:$0xff]
    %v596 = vld [vmem:[%s3 + $0xb0] sm:$0xff]
    %v597 = vld [vmem:[%s3 + $0xb8] sm:$0xff]
    %v598 = vld [vmem:[%s3 + $0xc0] sm:$0xff]
    %v599 = vld [vmem:[%s3 + $0xc8] sm:$0xff]
    %v600 = vld [vmem:[%s3 + $0xd0] sm:$0xff]
    %v601 = vld [vmem:[%s3 + $0xd8] sm:$0xff]
    %v602 = vld [vmem:[%s3 + $0xe0] sm:$0xff]
    %v603 = vld [vmem:[%s3 + $0xe8] sm:$0xff]
    %v604 = vld [vmem:[%s3 + $0xf0] sm:$0xff]
    %v605 = vld [vmem:[%s3 + $0xf8] sm:$0xff]
    %v606 = vadd.f32 %v542, %v574
    %v607 = vadd.f32 %v543, %v575
    %v608 = vadd.f32 %v544, %v576
    %v609 = vadd.f32 %v545, %v577
    %v610 = vadd.f32 %v546, %v578
    %v611 = vadd.f32 %v547, %v579
    %v612 = vadd.f32 %v548, %v580
    %v613 = vadd.f32 %v549, %v581
    %v614 = vadd.f32 %v550, %v582
    %v615 = vadd.f32 %v551, %v583
    %v616 = vadd.f32 %v552, %v584
    %v617 = vadd.f32 %v553, %v585
    %v618 = vadd.f32 %v554, %v586
    %v619 = vadd.f32 %v555, %v587
    %v620 = vadd.f32 %v556, %v588
    %v621 = vadd.f32 %v557, %v589
    %v622 = vadd.f32 %v558, %v590
    %v623 = vadd.f32 %v559, %v591
    %v624 = vadd.f32 %v560, %v592
    %v625 = vadd.f32 %v561, %v593
    %v626 = vadd.f32 %v562, %v594
    %v627 = vadd.f32 %v563, %v595
    %v628 = vadd.f32 %v564, %v596
    %v629 = vadd.f32 %v565, %v597
    %v630 = vadd.f32 %v566, %v598
    %v631 = vadd.f32 %v567, %v599
    %v632 = vadd.f32 %v568, %v600
    %v633 = vadd.f32 %v569, %v601
    %v634 = vadd.f32 %v570, %v602
    %v635 = vadd.f32 %v571, %v603
    %v636 = vadd.f32 %v572, %v604
    %v637 = vadd.f32 %v573, %v605
    %638 = vst [vmem:[%s4] sm:$0xff] %v606
    %639 = vst [vmem:[%s4 + $0x8] sm:$0xff] %v607
    %640 = vst [vmem:[%s4 + $0x10] sm:$0xff] %v608
    %641 = vst [vmem:[%s4 + $0x18] sm:$0xff] %v609
    %642 = vst [vmem:[%s4 + $0x20] sm:$0xff] %v610
    %643 = vst [vmem:[%s4 + $0x28] sm:$0xff] %v611
    %644 = vst [vmem:[%s4 + $0x30] sm:$0xff] %v612
    %645 = vst [vmem:[%s4 + $0x38] sm:$0xff] %v613
    %646 = vst [vmem:[%s4 + $0x40] sm:$0xff] %v614
    %647 = vst [vmem:[%s4 + $0x48] sm:$0xff] %v615
    %648 = vst [vmem:[%s4 + $0x50] sm:$0xff] %v616
    %649 = vst [vmem:[%s4 + $0x58] sm:$0xff] %v617
    %650 = vst [vmem:[%s4 + $0x60] sm:$0xff] %v618
    %651 = vst [vmem:[%s4 + $0x68] sm:$0xff] %v619
    %652 = vst [vmem:[%s4 + $0x70] sm:$0xff] %v620
    %653 = vst [vmem:[%s4 + $0x78] sm:$0xff] %v621
    %654 = vst [vmem:[%s4 + $0x80] sm:$0xff] %v622
    %655 = vst [vmem:[%s4 + $0x88] sm:$0xff] %v623
    %656 = vst [vmem:[%s4 + $0x90] sm:$0xff] %v624
    %657 = vst [vmem:[%s4 + $0x98] sm:$0xff] %v625
    %658 = vst [vmem:[%s4 + $0xa0] sm:$0xff] %v626
    %659 = vst [vmem:[%s4 + $0xa8] sm:$0xff] %v627
    %660 = vst [vmem:[%s4 + $0xb0] sm:$0xff] %v628
    %661 = vst [vmem:[%s4 + $0xb8] sm:$0xff] %v629
    %662 = vst [vmem:[%s4 + $0xc0] sm:$0xff] %v630
    %663 = vst [vmem:[%s4 + $0xc8] sm:$0xff] %v631
    %664 = vst [vmem:[%s4 + $0xd0] sm:$0xff] %v632
    %665 = vst [vmem:[%s4 + $0xd8] sm:$0xff] %v633
    %666 = vst [vmem:[%s4 + $0xe0] sm:$0xff] %v634
    %667 = vst [vmem:[%s4 + $0xe8] sm:$0xff] %v635
    %668 = vst [vmem:[%s4 + $0xf0] sm:$0xff] %v636
    %669 = vst [vmem:[%s4 + $0xf8] sm:$0xff] %v637
  $region25: #{resblock_forward.3} parent=0 // pred_fallthru
    _
  // Predicated region
  $region26: #{resblock_forward.3} parent=0 // pred_check
    _
  $region27: #{resblock_forward.3} parent=0 // pred_check_branch
    %671 = sbr.rel (0) target = $region29
  $region28: #{resblock_forward.3} parent=0 // pred_region
    _
  $region29: #{resblock_forward.3} parent=0 // pred_fallthru
    _
  // Predicated region
  $region30: #{resblock_forward.3} parent=0 // pred_check
    _
  $region31: #{resblock_forward.3} parent=0 // pred_check_branch
    %673 = sbr.rel (0) target = $region33
  $region32: #{resblock_forward.3} parent=0 // pred_region
    _
  $region33: #{resblock_forward.3} parent=0 // pred_fallthru
    _

</llo_original>
